<compile_context>
chip_gen: v7x
topology: tpu7x:2x2x1
jax: 0.10.0
libtpu: 0.0.40
codegen_flags: <defaults>
</compile_context>

<pallas_src>
import functools

import jax
import jax.numpy as jnp
from jax.experimental import pallas as pl
from jax.experimental.pallas import tpu as pltpu


_VMEM_LIMIT = 48 * 1024 * 1024  # below v7x's 64 MiB physical, above default scoped


# ---------------------------------------------------------------------------
# Kernel 1a: per-relation projections  HW = h @ [W_0 | ... | W_{R-1}]
# ---------------------------------------------------------------------------
def hw_kernel(h_ref, w_ref, hw_ref):
    hw_ref[...] = jnp.dot(h_ref[...], w_ref[...],
                          preferred_element_type=jnp.float32
                          ).astype(hw_ref.dtype)


def relation_projections(h_bf16, w_flat_bf16, *, tile_m):
    N, in_dim = h_bf16.shape
    rh = w_flat_bf16.shape[1]
    assert N % tile_m == 0
    return pl.pallas_call(
        hw_kernel,
        out_shape=jax.ShapeDtypeStruct((N, rh), jnp.bfloat16),
        grid_spec=pltpu.PrefetchScalarGridSpec(
            num_scalar_prefetch=0,
            grid=(N // tile_m,),
            in_specs=[
                pl.BlockSpec((tile_m, in_dim), lambda i: (i, 0)),
                pl.BlockSpec((in_dim, rh), lambda i: (0, 0)),
            ],
            out_specs=pl.BlockSpec((tile_m, rh), lambda i: (i, 0)),
        ),
        compiler_params=pltpu.CompilerParams(
            dimension_semantics=("parallel",),
            vmem_limit_bytes=_VMEM_LIMIT),
    )(h_bf16, w_flat_bf16)


# ---------------------------------------------------------------------------
# Kernel 1b: dense RGCN layer
#   out[i_tile] = ReLU( sum_rel (norm*A)[rel, i_tile, :] @ HW[:, rel] )
#   ssq[i_tile] = sum(out[i_tile]^2)   (reg term, fused into the epilogue)
# ---------------------------------------------------------------------------
def rgcn_layer_kernel(a_ref, hw_ref, out_ref, ssq_ref):
    r = pl.program_id(1)

    @pl.when(r == 0)
    def _():
        out_ref[...] = jnp.zeros_like(out_ref)

    # (TM, N) bf16 @ (N, H) bf16 -> (TM, H) f32, accumulated directly in the
    # VMEM-resident output block (no scratch copy).
    out_ref[...] += jnp.dot(a_ref[0], hw_ref[...],
                            preferred_element_type=jnp.float32)

    @pl.when(r == pl.num_programs(1) - 1)
    def _():
        y = jnp.maximum(out_ref[...], 0.0)   # norm already folded into A
        out_ref[...] = y
        ssq_ref[...] = jnp.sum(y * y, keepdims=True).reshape(1, 1, 1)


def rgcn_layer(a_normed_bf16, hw_bf16, h_dim, *, tile_m):
    R, N, _ = a_normed_bf16.shape
    assert N % tile_m == 0
    num_tiles = N // tile_m
    return pl.pallas_call(
        rgcn_layer_kernel,
        out_shape=(
            jax.ShapeDtypeStruct((N, h_dim), jnp.float32),
            jax.ShapeDtypeStruct((num_tiles, 1, 1), jnp.float32),
        ),
        grid_spec=pltpu.PrefetchScalarGridSpec(
            num_scalar_prefetch=0,
            grid=(num_tiles, R),                 # rel = innermost reduction
            in_specs=[
                pl.BlockSpec((1, tile_m, N), lambda i, r: (r, i, 0)),
                pl.BlockSpec((N, h_dim), lambda i, r: (0, r)),
            ],
            out_specs=(
                pl.BlockSpec((tile_m, h_dim), lambda i, r: (i, 0)),
                pl.BlockSpec((1, 1, 1), lambda i, r: (i, 0, 0)),
            ),
        ),
        compiler_params=pltpu.CompilerParams(
            dimension_semantics=("parallel", "arbitrary"),
            vmem_limit_bytes=_VMEM_LIMIT),
    )(a_normed_bf16, hw_bf16)


# ---------------------------------------------------------------------------
# Kernel 2: DistMult scoring + losses (tiled over triplets, lane-dense score)
# ---------------------------------------------------------------------------
def score_loss_kernel(s_ref, r_ref, o_ref, lab_ref, wrel_ref,
                      score_ref, ploss_ref, wreg_ref, bce_acc, *, t_total):
    t = pl.program_id(0)

    # DistMult: score = sigmoid( sum_h s*r*o ). Inputs are laid out (H, TT)
    # so the reduction runs along sublanes and the result is lane-dense (1,TT).
    prod = s_ref[...] * r_ref[...] * o_ref[...]
    raw = jnp.sum(prod, axis=0, keepdims=True)            # (1, TT)
    score = jax.nn.sigmoid(raw)
    score_ref[...] = score

    # F.binary_cross_entropy_with_logits(score, labels) — applied to the
    # already-sigmoided score, exactly as the reference PyTorch code does.
    x = score
    y = lab_ref[...]
    bce = jnp.maximum(x, 0.0) - x * y + jnp.log1p(jnp.exp(-jnp.abs(x)))

    @pl.when(t == 0)
    def _():
        bce_acc[...] = jnp.zeros_like(bce_acc)

    bce_acc[...] += jnp.sum(bce, keepdims=True)

    @pl.when(t == pl.num_programs(0) - 1)
    def _():
        ploss_ref[...] = bce_acc[...] / t_total
        w = wrel_ref[...]
        wreg_ref[...] = jnp.mean(w * w, keepdims=True)


def score_and_loss(s_t, r_t, o_t, labels_row, w_relation, *, tile_t):
    h_dim, T = s_t.shape
    assert T % tile_t == 0
    kernel = functools.partial(score_loss_kernel, t_total=float(T))
    return pl.pallas_call(
        kernel,
        out_shape=(
            jax.ShapeDtypeStruct((1, T), jnp.float32),     # lane-dense score
            jax.ShapeDtypeStruct((1, 1), jnp.float32),     # predict_loss
            jax.ShapeDtypeStruct((1, 1), jnp.float32),     # mean(w_relation^2)
        ),
        grid_spec=pltpu.PrefetchScalarGridSpec(
            num_scalar_prefetch=0,
            grid=(T // tile_t,),
            in_specs=[
                pl.BlockSpec((h_dim, tile_t), lambda t: (0, t)),
                pl.BlockSpec((h_dim, tile_t), lambda t: (0, t)),
                pl.BlockSpec((h_dim, tile_t), lambda t: (0, t)),
                pl.BlockSpec((1, tile_t), lambda t: (0, t)),
                pl.BlockSpec(w_relation.shape, lambda t: (0, 0)),
            ],
            out_specs=(
                pl.BlockSpec((1, tile_t), lambda t: (0, t)),
                pl.BlockSpec((1, 1), lambda t: (0, 0)),
                pl.BlockSpec((1, 1), lambda t: (0, 0)),
            ),
            scratch_shapes=[pltpu.VMEM((1, 1), jnp.float32)],
        ),
        compiler_params=pltpu.CompilerParams(
            dimension_semantics=("arbitrary",),
            vmem_limit_bytes=_VMEM_LIMIT),
    )(s_t, r_t, o_t, labels_row, w_relation)


# ---------------------------------------------------------------------------
# Parameter init (deterministic, mirrors nn.init.xavier_uniform_ w/ relu gain)
# ---------------------------------------------------------------------------
def xavier_uniform(key, shape, gain):
    fan_out, fan_in = shape[0], shape[-1]
    bound = gain * jnp.sqrt(6.0 / (fan_in + fan_out))
    return jax.random.uniform(key, shape, jnp.float32, -bound, bound)


class LinkPredictPallas:
    def __init__(self, key, in_dim, h_dim, num_rels, reg_param=0.0, kl_param=1.0):
        k1, k2 = jax.random.split(key)
        gain = jnp.sqrt(2.0)  # nn.init.calculate_gain('relu')
        self.w_relation = xavier_uniform(k1, (num_rels, h_dim), gain)
        # stand-in RGCN layer weights: one (in_dim, h_dim) matrix per edge
        # type (num_rels * 2 edge types, as in the torch ctor).
        self.W = jax.random.normal(k2, (num_rels * 2, in_dim, h_dim),
                                   jnp.float32) * (1.0 / jnp.sqrt(in_dim))
        self.in_dim = in_dim
        self.h_dim = h_dim
        self.reg_param = reg_param
        self.kl_param = kl_param
        self._embed_sumsq = jnp.float32(0.0)

    def forward(self, A, h, norm):
        # TODO(synk): exact `model_class` (RGCN / KGVAE) semantics are external
        # to this module; a dense relational GCN layer is used as a stand-in.
        N = h.shape[0]
        tile_m = 128 if N % 128 == 0 else N

        # Fold the per-destination-node norm into A while casting to bf16
        # (A is a 0/1 adjacency, so only the norm scaling is rounded).
        a_normed = (A * norm.reshape(1, N, 1)).astype(jnp.bfloat16)

        # Hoisted per-relation projections: one wide, lane-dense matmul.
        w_flat = jnp.transpose(self.W, (1, 0, 2)).reshape(self.in_dim, -1)
        hw = relation_projections(h.astype(jnp.bfloat16),
                                  w_flat.astype(jnp.bfloat16), tile_m=tile_m)

        embed, ssq_tiles = rgcn_layer(a_normed, hw, self.h_dim, tile_m=tile_m)
        # per-node-tile sum(embed^2) is produced by the RGCN epilogue; combine
        # the (num_tiles,) partials here (tiny), used by the reg term later.
        self._embed_sumsq = jnp.sum(ssq_tiles)
        return embed

    def get_loss(self, embed, triplets, labels):
        # TODO(synk): the triplet gather is left to XLA (jnp.take); fusing it
        # into the score kernel would need a manual per-row DMA gather.
        s_t = jnp.take(embed, triplets[:, 0], axis=0).T            # (H, T)
        r_t = jnp.take(self.w_relation, triplets[:, 1], axis=0).T  # (H, T)
        o_t = jnp.take(embed, triplets[:, 2], axis=0).T            # (H, T)
        T = triplets.shape[0]
        tile_t = 128 if T % 128 == 0 else T
        labels_row = labels.reshape(1, T).astype(jnp.float32)

        score_row, ploss, wreg = score_and_loss(
            s_t, r_t, o_t, labels_row, self.w_relation, tile_t=tile_t)

        reg_loss = self._embed_sumsq / embed.size + wreg[0, 0]
        kl = jnp.float32(0.0)  # TODO(synk): rgcn.get_kl() is external (KGVAE only)
        loss = ploss[0, 0] + self.reg_param * reg_loss + self.kl_param * kl
        return score_row.reshape(-1), loss, ploss[0, 0], kl


# ---------------------------------------------------------------------------
if __name__ == "__main__":
    N = 256          # num nodes
    IN_DIM = 128     # lane-dense (>=128) dims per the perf review
    H_DIM = 128
    NUM_RELS = 3     # -> 2*NUM_RELS = 6 edge types in the graph
    T = 256          # num triplets

    key = jax.random.PRNGKey(0)
    k_param, k_a, k_h, k_norm, k_trip, k_lab = jax.random.split(key, 6)

    model = LinkPredictPallas(k_param, IN_DIM, H_DIM, NUM_RELS,
                              reg_param=0.01, kl_param=1.0)

    # dense per-relation adjacency (stand-in for DGL graph `g` + edge types `r`)
    A = (jax.random.uniform(k_a, (2 * NUM_RELS, N, N)) < 0.1).astype(jnp.float32)
    h = jax.random.normal(k_h, (N, IN_DIM), jnp.float32)
    norm = jax.random.uniform(k_norm, (N, 1), jnp.float32, 0.5, 1.5)

    kt0, kt1, kt2 = jax.random.split(k_trip, 3)
    triplets = jnp.stack([
        jax.random.randint(kt0, (T,), 0, N),
        jax.random.randint(kt1, (T,), 0, NUM_RELS),
        jax.random.randint(kt2, (T,), 0, N),
    ], axis=1).astype(jnp.int32)
    labels = (jax.random.uniform(k_lab, (T,)) < 0.5).astype(jnp.float32)

    embed = model.forward(A, h, norm)
    score, loss, predict_loss, kl = model.get_loss(embed, triplets, labels)

    jax.block_until_ready((embed, score, loss, predict_loss, kl))
    print("KERNEL_OK")
</pallas_src>

<mosaic_0001>
module attributes {stable_mosaic.version = 11 : i64} {
  func.func @hw_kernel(%arg0: i32, %arg1: memref<128x128xbf16, #tpu.memory_space<vmem>>, %arg2: memref<128x768xbf16, #tpu.memory_space<vmem>>, %arg3: memref<128x768xbf16, #tpu.memory_space<vmem>>) attributes {dimension_semantics = [#tpu.dimension_semantics<parallel>], iteration_bounds = array<i64: 2>, scalar_prefetch = 0 : i64, scratch_operands = 0 : i64, tpu.core_type = #tpu.core_type<tc>, window_params = [{transform_indices = @transform_0, window_bounds = array<i64: 128, 128>}, {pipeline_mode = #tpu.pipeline_mode<synchronous>, transform_indices = @transform_1, window_bounds = array<i64: 128, 768>}, {transform_indices = @transform_2, window_bounds = array<i64: 128, 768>}]} {
    %c0 = arith.constant 0 : index
    %c0_0 = arith.constant 0 : index
    %0 = vector.load %arg1[%c0, %c0_0] : memref<128x128xbf16, #tpu.memory_space<vmem>>, vector<128x128xbf16>
    %c0_1 = arith.constant 0 : index
    %c0_2 = arith.constant 0 : index
    %1 = vector.load %arg2[%c0_1, %c0_2] : memref<128x768xbf16, #tpu.memory_space<vmem>>, vector<128x768xbf16>
    %cst = arith.constant dense<0.000000e+00> : vector<128x768xf32>
    %2 = tpu.matmul %0, %1, %cst {dimension_numbers = #tpu.dot_dimension_numbers<[1], [0], [0], [1], [0, 0, 1, 1], [], []>} : vector<128x128xbf16>, vector<128x768xbf16>, vector<128x768xf32> -> vector<128x768xf32>
    %3 = arith.truncf %2 : vector<128x768xf32> to vector<128x768xbf16>
    %c0_3 = arith.constant 0 : index
    %c0_4 = arith.constant 0 : index
    %4 = vector.load %arg3[%c0_3, %c0_4] : memref<128x768xbf16, #tpu.memory_space<vmem>>, vector<128x768xbf16>
    tpu.vector_store %arg3[%c0_3, %c0_4], %3 {strides = array<i32>} : memref<128x768xbf16, #tpu.memory_space<vmem>>, vector<128x768xbf16>,
    return
  }
  func.func @transform_0(%arg0: i32) -> (i32, i32) {
    %c0_i32 = arith.constant 0 : i32
    %c0_i32_0 = arith.constant 0 : i32
    return %arg0, %c0_i32 : i32, i32
  }
  func.func @transform_1(%arg0: i32) -> (i32, i32) {
    %c0_i32 = arith.constant 0 : i32
    %c0_i32_0 = arith.constant 0 : i32
    %c0_i32_1 = arith.constant 0 : i32
    return %c0_i32, %c0_i32_0 : i32, i32
  }
  func.func @transform_2(%arg0: i32) -> (i32, i32) {
    %c0_i32 = arith.constant 0 : i32
    %c0_i32_0 = arith.constant 0 : i32
    return %arg0, %c0_i32 : i32, i32
  }
}

</mosaic_0001>

<llo_original>
// kernel: tpu_custom_call.1
$region0: #{tpu_custom_call.1}
  #allocation0 [shape = 'u32[]', space=smem, size = 0x4, offset = 0x4, fixed_abs, tag = 'smem constant byte address 0x4 - core index']
  #allocation1 [shape = 'u32[144,128]{1,0:T(1,128)}', space=vmem, size = 0x12000, scoped, tag = 'internal scratch']
  %s0 = inlined_call_operand.hbm [shape: bf16[256,128], index: 0, kind: input, shape index: {}]
  %s1 = inlined_call_operand.hbm [shape: bf16[128,768], index: 1, kind: input, shape index: {}]
  %s2 = inlined_call_operand.hbm [shape: bf16[256,768], index: 2, kind: output, shape index: {}]
  %s3 = sld [smem:[#allocation0]]
  $region49: #{tpu_custom_call.1} parent=0
    _
  %s5 = ssub.s32 1, %s3
  %s6 = scalar_select 0, %s5, %s3
  $region1: #{tpu_custom_call.1} parent=0
    #allocation2 [shape = 'u8[65536]{0}', space=vmem, size = 0x10000, scoped, tag = 'input window, operand 0']
    #allocation3 [shape = 's32[2]{0}', space=sflag, size = 0x8, scoped, tag = 'scoped memory for tpu_custom_call.1']
    #allocation4 [shape = 's32[2]{0}', space=sflag, size = 0x8, scoped, tag = 'scoped memory for tpu_custom_call.1']
    #allocation5 [shape = 'u8[196608]{0}', space=vmem, size = 0x30000, scoped, tag = 'input window, operand 1, single buffered']
    #allocation6 [shape = 's32[1]{0}', space=sflag, size = 0x4, scoped, tag = 'scoped memory for tpu_custom_call.1']
    #allocation7 [shape = 'u8[393216]{0}', space=vmem, size = 0x60000, scoped, tag = 'output window, operand 0']
    %7 = vsyncpa [#allocation3], 0
    %s8 = scalar_lea.sflag [#allocation3], 1
    %9 = vsyncpa %s8, 0
    %10 = vsyncpa [#allocation6], 0
    %11 = vsyncpa [#allocation4], 0
    %s12 = scalar_lea.sflag [#allocation4], 1
    %13 = vsyncpa %s12, 0
    loop: start=0, step=1, limit=4
    $region2: #{tpu_custom_call.1} parent=1 // loop_pre_header
      _
    $region3: #{tpu_custom_call.1} parent=1 // loop_header
      %s15 = sphi 0, %s19
      %p16 = scmp.ge.s32.totalorder %s15, 4
      %s25 = sphi 0, %s27
      %s28 = sphi 0, %s25
      %s29 = sphi 0, %s28
      %s45 = sphi 0, %s29
      %s49 = sphi 0, %s49
      %s51 = sphi 0, %s49
      %s52 = sphi 0, %s51
      %s66 = sphi 0, %s52
      %s72 = sphi 0, %s74
      %s75 = sphi 0, %s72
      %s76 = sphi 0, %s75
      %s92 = sphi 0, %s76
    $region4: #{tpu_custom_call.1} parent=1 // loop_header_branch
      %18 = sbr.rel (%p16) target = $region8
    $region5: #{tpu_custom_call.1} parent=1 // loop_body
      %s20 = ssub.s32 %s15, 1
      %s21 = ssub.s32 %s15, 2
      %s22 = sadd.s32 %s15, 1
      %s23 = ssub.s32 %s15, %s22
      %p24 = scmp.eq.s32.totalorder %s23, 0
      %s26 = sadd.s32 %s25, 1
      %s27 = scalar_select %p24, %s25, %s26
      %p30 = pneg %p24
      %p31 = scmp.eq.s32.totalorder %s15, 1
      %p32 = por %p30, %p31
      %p33 = scmp.ne.s32.totalorder %s25, %s28
      %p34 = scmp.eq.s32.totalorder %s15, 0
      %p35 = por %p33, %p34
      %p36 = scmp.ne.s32.totalorder %s25, %s28
      %p37 = scmp.eq.s32.totalorder %s20, 1
      %p38 = por %p36, %p37
      %p39 = scmp.ne.s32.totalorder %s28, %s29
      %p40 = scmp.eq.s32.totalorder %s20, 0
      %p41 = por %p39, %p40
      %p42 = scmp.ne.s32.totalorder %s28, %s29
      %p43 = scmp.eq.s32.totalorder %s21, 1
      %p44 = por %p42, %p43
      %p46 = scmp.ne.s32.totalorder %s29, %s45
      %p47 = scmp.eq.s32.totalorder %s21, 0
      %p48 = por %p46, %p47
      %s50 = sadd.s32 %s49, 1
      %p53 = scmp.eq.s32.totalorder %s15, 1
      %p54 = scmp.ne.s32.totalorder %s49, %s51
      %p55 = scmp.eq.s32.totalorder %s15, 0
      %p56 = por %p54, %p55
      %p57 = scmp.ne.s32.totalorder %s49, %s51
      %p58 = scmp.eq.s32.totalorder %s20, 1
      %p59 = por %p57, %p58
      %p60 = scmp.ne.s32.totalorder %s51, %s52
      %p61 = scmp.eq.s32.totalorder %s20, 0
      %p62 = por %p60, %p61
      %p63 = scmp.ne.s32.totalorder %s51, %s52
      %p64 = scmp.eq.s32.totalorder %s21, 1
      %p65 = por %p63, %p64
      %p67 = scmp.ne.s32.totalorder %s52, %s66
      %p68 = scmp.eq.s32.totalorder %s21, 0
      %p69 = por %p67, %p68
      %s70 = ssub.s32 %s15, %s22
      %p71 = scmp.eq.s32.totalorder %s70, 0
      %s73 = sadd.s32 %s72, 1
      %s74 = scalar_select %p71, %s72, %s73
      %p77 = pneg %p71
      %p78 = scmp.eq.s32.totalorder %s15, 1
      %p79 = por %p77, %p78
      %p80 = scmp.ne.s32.totalorder %s72, %s75
      %p81 = scmp.eq.s32.totalorder %s15, 0
      %p82 = por %p80, %p81
      %p83 = scmp.ne.s32.totalorder %s72, %s75
      %p84 = scmp.eq.s32.totalorder %s20, 1
      %p85 = por %p83, %p84
      %p86 = scmp.ne.s32.totalorder %s75, %s76
      %p87 = scmp.eq.s32.totalorder %s20, 0
      %p88 = por %p86, %p87
      %p89 = scmp.ne.s32.totalorder %s75, %s76
      %p90 = scmp.eq.s32.totalorder %s21, 1
      %p91 = por %p89, %p90
      %p93 = scmp.ne.s32.totalorder %s76, %s92
      %p94 = scmp.eq.s32.totalorder %s21, 0
      %p95 = por %p93, %p94
      %p96 = scmp.le.s32.totalorder 1, %s15
      %p97 = scmp.lt.s32.totalorder %s15, 3
      %p98 = pnand %p96, %p97
      %p99 = pneg %p98
      // Predicated region
      $region9: #{tpu_custom_call.1} parent=5 // pred_check
        _
      $region10: #{tpu_custom_call.1} parent=5 // pred_check_branch
        %101 = sbr.rel (%p98) target = $region12
      $region11: #{tpu_custom_call.1} parent=5 // pred_region
        %s102 = ssub.s32 %s15, 1
        // Predicated region
        $region13: #{tpu_custom_call.1} parent=11 // pred_check
          %p103 = pneg %p62
        $region14: #{tpu_custom_call.1} parent=11 // pred_check_branch
          %105 = sbr.rel (%p103) target = $region16
        $region15: #{tpu_custom_call.1} parent=11 // pred_region
          %s107 = ssub.s32 6144, 6144
          %108 = vsyncadd [#allocation6], %s107
          %s109 = sshll.u32 [#allocation5], 4
          %s110 = int_to_ptr.vmem [resolvable:$true] %s109
          %115 = dma.hbm_to_vmem [thread:$0]  %s1, 6144, %s110, [#allocation6], 384, 384, 24
        $region16: #{tpu_custom_call.1} parent=11 // pred_fallthru
          _
      $region12: #{tpu_custom_call.1} parent=5 // pred_fallthru
        _
      %p116 = scmp.lt.s32.totalorder %s15, 2
      // Predicated region
      $region17: #{tpu_custom_call.1} parent=5 // pred_check
        %p117 = pneg %p116
      $region18: #{tpu_custom_call.1} parent=5 // pred_check_branch
        %119 = sbr.rel (%p117) target = $region20
      $region19: #{tpu_custom_call.1} parent=5 // pred_region
        // Predicated region
        $region21: #{tpu_custom_call.1} parent=19 // pred_check
          %p120 = pneg %p35
        $region22: #{tpu_custom_call.1} parent=19 // pred_check_branch
          %122 = sbr.rel (%p120) target = $region24
        $region23: #{tpu_custom_call.1} parent=19 // pred_region
          %s123 = sand.u32 %s25, 1
          %s124 = scalar_lea.sflag [#allocation3], %s123
          %s125 = sand.u32 %s25, 1
          %s126 = smul.addr %s125, 64
          %s127 = scalar_lea.vmem [#allocation2], %s126
          %s128 = smul.u32 16, %s15
          %s130 = ssub.s32 1024, 1024
          %131 = vsyncadd %s124, %s130
          %s132 = smul.addr %s128, 64
          %s133 = scalar_lea.hbm %s0, %s132
          %s134 = sshll.u32 %s127, 4
          %s135 = int_to_ptr.vmem [resolvable:$true] %s134
          %140 = dma.hbm_to_vmem [thread:$0]  %s133, 1024, %s135, %s124, 64, 64, 4
        $region24: #{tpu_custom_call.1} parent=19 // pred_fallthru
          _
      $region20: #{tpu_custom_call.1} parent=5 // pred_fallthru
        _
      %p141 = scmp.le.s32.totalorder 1, %s15
      %p142 = scmp.lt.s32.totalorder %s15, 3
      %p143 = pnand %p141, %p142
      %p144 = pneg %p143
      // Predicated region
      $region25: #{tpu_custom_call.1} parent=5 // pred_check
        _
      $region26: #{tpu_custom_call.1} parent=5 // pred_check_branch
        %146 = sbr.rel (%p143) target = $region28
      $region27: #{tpu_custom_call.1} parent=5 // pred_region
        %s147 = ssub.s32 %s15, 1
        %s148 = sand.u32 %s28, 1
        %s149 = scalar_lea.sflag [#allocation3], %s148
        %s150 = sand.u32 %s28, 1
        %s151 = smul.addr %s150, 64
        %s152 = scalar_lea.vmem [#allocation2], %s151
        // Predicated region
        $region29: #{tpu_custom_call.1} parent=27 // pred_check
          %p153 = pneg %p41
        $region30: #{tpu_custom_call.1} parent=27 // pred_check_branch
          %155 = sbr.rel (%p153) target = $region32
        $region31: #{tpu_custom_call.1} parent=27 // pred_region
          %156 = dma.done %s149, 1024
        $region32: #{tpu_custom_call.1} parent=27 // pred_fallthru
          _
        // Predicated region
        $region33: #{tpu_custom_call.1} parent=27 // pred_check
          %p157 = pneg %p62
        $region34: #{tpu_custom_call.1} parent=27 // pred_check_branch
          %159 = sbr.rel (%p157) target = $region36
        $region35: #{tpu_custom_call.1} parent=27 // pred_region
          %160 = dma.done [#allocation6], 6144
        $region36: #{tpu_custom_call.1} parent=27 // pred_fallthru
          _
        %s161 = sand.u32 %s28, 1
        %s162 = scalar_lea.sflag [#allocation3], %s161
        %s163 = sand.u32 %s28, 1
        %s164 = smul.addr %s163, 64
        %s165 = scalar_lea.vmem [#allocation2], %s164
        %p166 = pneg %p41
        %p167 = pneg %p38
        %p168 = pneg %p62
        %p169 = pneg %p59
        %p170 = pneg %p88
        %p171 = pneg %p85
        %s172 = sand.u32 %s75, 1
        %s173 = scalar_lea.sflag [#allocation4], %s172
        %s174 = sand.u32 %s75, 1
        %s175 = smul.addr %s174, 384
        %s176 = scalar_lea.vmem [#allocation7], %s175
        %s177 = smul.u32 16, %s20
        %s178 = smul.u32 16, %s20
        %v180 = vld [vmem:[%s152] sm:$0xf]
        %v181 = vld [vmem:[%s152 + $0x4] sm:$0xf]
        %v182 = vld [vmem:[%s152 + $0x8] sm:$0xf]
        %v183 = vld [vmem:[%s152 + $0xc] sm:$0xf]
        %v184 = vld [vmem:[%s152 + $0x10] sm:$0xf]
        %v185 = vld [vmem:[%s152 + $0x14] sm:$0xf]
        %v186 = vld [vmem:[%s152 + $0x18] sm:$0xf]
        %v187 = vld [vmem:[%s152 + $0x1c] sm:$0xf]
        %v188 = vld [vmem:[%s152 + $0x20] sm:$0xf]
        %v189 = vld [vmem:[%s152 + $0x24] sm:$0xf]
        %v190 = vld [vmem:[%s152 + $0x28] sm:$0xf]
        %v191 = vld [vmem:[%s152 + $0x2c] sm:$0xf]
        %v192 = vld [vmem:[%s152 + $0x30] sm:$0xf]
        %v193 = vld [vmem:[%s152 + $0x34] sm:$0xf]
        %v194 = vld [vmem:[%s152 + $0x38] sm:$0xf]
        %v195 = vld [vmem:[%s152 + $0x3c] sm:$0xf]
        %v196 = vld [vmem:[#allocation5] sm:$0xff]
        %v197 = vld [vmem:[#allocation5 + $0x8] sm:$0xff]
        %v198 = vld [vmem:[#allocation5 + $0x10] sm:$0xff]
        %v199 = vld [vmem:[#allocation5 + $0x18] sm:$0xff]
        %v200 = vld [vmem:[#allocation5 + $0x20] sm:$0xff]
        %v201 = vld [vmem:[#allocation5 + $0x28] sm:$0xff]
        %v202 = vld [vmem:[#allocation5 + $0x30] sm:$0xff]
        %v203 = vld [vmem:[#allocation5 + $0x38] sm:$0xff]
        %v204 = vld [vmem:[#allocation5 + $0x40] sm:$0xff]
        %v205 = vld [vmem:[#allocation5 + $0x48] sm:$0xff]
        %v206 = vld [vmem:[#allocation5 + $0x50] sm:$0xff]
        %v207 = vld [vmem:[#allocation5 + $0x58] sm:$0xff]
        %v208 = vld [vmem:[#allocation5 + $0x60] sm:$0xff]
        %v209 = vld [vmem:[#allocation5 + $0x68] sm:$0xff]
        %v210 = vld [vmem:[#allocation5 + $0x70] sm:$0xff]
        %v211 = vld [vmem:[#allocation5 + $0x78] sm:$0xff]
        %v212 = vld [vmem:[#allocation5 + $0x80] sm:$0xff]
        %v213 = vld [vmem:[#allocation5 + $0x88] sm:$0xff]
        %v214 = vld [vmem:[#allocation5 + $0x90] sm:$0xff]
        %v215 = vld [vmem:[#allocation5 + $0x98] sm:$0xff]
        %v216 = vld [vmem:[#allocation5 + $0xa0] sm:$0xff]
        %v217 = vld [vmem:[#allocation5 + $0xa8] sm:$0xff]
        %v218 = vld [vmem:[#allocation5 + $0xb0] sm:$0xff]
        %v219 = vld [vmem:[#allocation5 + $0xb8] sm:$0xff]
        %v220 = vld [vmem:[#allocation5 + $0xc0] sm:$0xff]
        %v221 = vld [vmem:[#allocation5 + $0xc8] sm:$0xff]
        %v222 = vld [vmem:[#allocation5 + $0xd0] sm:$0xff]
        %v223 = vld [vmem:[#allocation5 + $0xd8] sm:$0xff]
        %v224 = vld [vmem:[#allocation5 + $0xe0] sm:$0xff]
        %v225 = vld [vmem:[#allocation5 + $0xe8] sm:$0xff]
        %v226 = vld [vmem:[#allocation5 + $0xf0] sm:$0xff]
        %v227 = vld [vmem:[#allocation5 + $0xf8] sm:$0xff]
        %v228 = vld [vmem:[#allocation5 + $0x100] sm:$0xff]
        %v229 = vld [vmem:[#allocation5 + $0x108] sm:$0xff]
        %v230 = vld [vmem:[#allocation5 + $0x110] sm:$0xff]
        %v231 = vld [vmem:[#allocation5 + $0x118] sm:$0xff]
        %v232 = vld [vmem:[#allocation5 + $0x120] sm:$0xff]
        %v233 = vld [vmem:[#allocation5 + $0x128] sm:$0xff]
        %v234 = vld [vmem:[#allocation5 + $0x130] sm:$0xff]
        %v235 = vld [vmem:[#allocation5 + $0x138] sm:$0xff]
        %v236 = vld [vmem:[#allocation5 + $0x140] sm:$0xff]
        %v237 = vld [vmem:[#allocation5 + $0x148] sm:$0xff]
        %v238 = vld [vmem:[#allocation5 + $0x150] sm:$0xff]
        %v239 = vld [vmem:[#allocation5 + $0x158] sm:$0xff]
        %v240 = vld [vmem:[#allocation5 + $0x160] sm:$0xff]
        %v241 = vld [vmem:[#allocation5 + $0x168] sm:$0xff]
        %v242 = vld [vmem:[#allocation5 + $0x170] sm:$0xff]
        %v243 = vld [vmem:[#allocation5 + $0x178] sm:$0xff]
        %v260 = vunpack.c.l.b16 %v180
        %v261 = vunpack.c.l.b16 %v181
        %v262 = vunpack.c.l.b16 %v182
        %v263 = vunpack.c.l.b16 %v183
        %v264 = vunpack.c.l.b16 %v184
        %v265 = vunpack.c.l.b16 %v185
        %v266 = vunpack.c.l.b16 %v186
        %v267 = vunpack.c.l.b16 %v187
        %v268 = vunpack.c.l.b16 %v188
        %v269 = vunpack.c.l.b16 %v189
        %v270 = vunpack.c.l.b16 %v190
        %v271 = vunpack.c.l.b16 %v191
        %v272 = vunpack.c.l.b16 %v192
        %v273 = vunpack.c.l.b16 %v193
        %v274 = vunpack.c.l.b16 %v194
        %v275 = vunpack.c.l.b16 %v195
        %v276 = vpack.c.b16 %v261, %v260
        %v277 = vpack.c.b16 %v263, %v262
        %v278 = vpack.c.b16 %v265, %v264
        %v279 = vpack.c.b16 %v267, %v266
        %v280 = vpack.c.b16 %v269, %v268
        %v281 = vpack.c.b16 %v271, %v270
        %v282 = vpack.c.b16 %v273, %v272
        %v283 = vpack.c.b16 %v275, %v274
        %v340 = vunpack.c.l.b16 %v196
        %v341 = vunpack.c.h.b16 %v196
        %v342 = vunpack.c.l.b16 %v197
        %v343 = vunpack.c.h.b16 %v197
        %v344 = vunpack.c.l.b16 %v198
        %v345 = vunpack.c.h.b16 %v198
        %v346 = vunpack.c.l.b16 %v199
        %v347 = vunpack.c.h.b16 %v199
        %v348 = vunpack.c.l.b16 %v200
        %v349 = vunpack.c.h.b16 %v200
        %v350 = vunpack.c.l.b16 %v201
        %v351 = vunpack.c.h.b16 %v201
        %v352 = vunpack.c.l.b16 %v202
        %v353 = vunpack.c.h.b16 %v202
        %v354 = vunpack.c.l.b16 %v203
        %v355 = vunpack.c.h.b16 %v203
        %v356 = vunpack.c.l.b16 %v204
        %v357 = vunpack.c.h.b16 %v204
        %v358 = vunpack.c.l.b16 %v205
        %v359 = vunpack.c.h.b16 %v205
        %v360 = vunpack.c.l.b16 %v206
        %v361 = vunpack.c.h.b16 %v206
        %v362 = vunpack.c.l.b16 %v207
        %v363 = vunpack.c.h.b16 %v207
        %v364 = vunpack.c.l.b16 %v208
        %v365 = vunpack.c.h.b16 %v208
        %v366 = vunpack.c.l.b16 %v209
        %v367 = vunpack.c.h.b16 %v209
        %v368 = vunpack.c.l.b16 %v210
        %v369 = vunpack.c.h.b16 %v210
        %v370 = vunpack.c.l.b16 %v211
        %v371 = vunpack.c.h.b16 %v211
        %v372 = vunpack.c.l.b16 %v212
        %v373 = vunpack.c.h.b16 %v212
        %v374 = vunpack.c.l.b16 %v213
        %v375 = vunpack.c.h.b16 %v213
        %v376 = vunpack.c.l.b16 %v214
        %v377 = vunpack.c.h.b16 %v214
        %v378 = vunpack.c.l.b16 %v215
        %v379 = vunpack.c.h.b16 %v215
        %v380 = vunpack.c.l.b16 %v216
        %v381 = vunpack.c.h.b16 %v216
        %v382 = vunpack.c.l.b16 %v217
        %v383 = vunpack.c.h.b16 %v217
        %v384 = vunpack.c.l.b16 %v218
        %v385 = vunpack.c.h.b16 %v218
        %v386 = vunpack.c.l.b16 %v219
        %v387 = vunpack.c.h.b16 %v219
        %v388 = vunpack.c.l.b16 %v220
        %v389 = vunpack.c.h.b16 %v220
        %v390 = vunpack.c.l.b16 %v221
        %v391 = vunpack.c.h.b16 %v221
        %v392 = vunpack.c.l.b16 %v222
        %v393 = vunpack.c.h.b16 %v222
        %v394 = vunpack.c.l.b16 %v223
        %v395 = vunpack.c.h.b16 %v223
        %v396 = vunpack.c.l.b16 %v224
        %v397 = vunpack.c.h.b16 %v224
        %v398 = vunpack.c.l.b16 %v225
        %v399 = vunpack.c.h.b16 %v225
        %v400 = vunpack.c.l.b16 %v226
        %v401 = vunpack.c.h.b16 %v226
        %v402 = vunpack.c.l.b16 %v227
        %v403 = vunpack.c.h.b16 %v227
        %v404 = vunpack.c.l.b16 %v228
        %v405 = vunpack.c.h.b16 %v228
        %v406 = vunpack.c.l.b16 %v229
        %v407 = vunpack.c.h.b16 %v229
        %v408 = vunpack.c.l.b16 %v230
        %v409 = vunpack.c.h.b16 %v230
        %v410 = vunpack.c.l.b16 %v231
        %v411 = vunpack.c.h.b16 %v231
        %v412 = vunpack.c.l.b16 %v232
        %v413 = vunpack.c.h.b16 %v232
        %v414 = vunpack.c.l.b16 %v233
        %v415 = vunpack.c.h.b16 %v233
        %v416 = vunpack.c.l.b16 %v234
        %v417 = vunpack.c.h.b16 %v234
        %v418 = vunpack.c.l.b16 %v235
        %v419 = vunpack.c.h.b16 %v235
        %v420 = vunpack.c.l.b16 %v236
        %v421 = vunpack.c.h.b16 %v236
        %v422 = vunpack.c.l.b16 %v237
        %v423 = vunpack.c.h.b16 %v237
        %v424 = vunpack.c.l.b16 %v238
        %v425 = vunpack.c.h.b16 %v238
        %v426 = vunpack.c.l.b16 %v239
        %v427 = vunpack.c.h.b16 %v239
        %v428 = vunpack.c.l.b16 %v240
        %v429 = vunpack.c.h.b16 %v240
        %v430 = vunpack.c.l.b16 %v241
        %v431 = vunpack.c.h.b16 %v241
        %v432 = vunpack.c.l.b16 %v242
        %v433 = vunpack.c.h.b16 %v242
        %v434 = vunpack.c.l.b16 %v243
        %v435 = vunpack.c.h.b16 %v243
        %v436 = vpack.c.b16 %v346, %v340
        %v437 = vpack.c.b16 %v347, %v341
        %v438 = vpack.c.b16 %v348, %v342
        %v439 = vpack.c.b16 %v349, %v343
        %v440 = vpack.c.b16 %v350, %v344
        %v441 = vpack.c.b16 %v351, %v345
        %v442 = vpack.c.b16 %v358, %v352
        %v443 = vpack.c.b16 %v359, %v353
        %v444 = vpack.c.b16 %v360, %v354
        %v445 = vpack.c.b16 %v361, %v355
        %v446 = vpack.c.b16 %v362, %v356
        %v447 = vpack.c.b16 %v363, %v357
        %v448 = vpack.c.b16 %v370, %v364
        %v449 = vpack.c.b16 %v371, %v365
        %v450 = vpack.c.b16 %v372, %v366
        %v451 = vpack.c.b16 %v373, %v367
        %v452 = vpack.c.b16 %v374, %v368
        %v453 = vpack.c.b16 %v375, %v369
        %v454 = vpack.c.b16 %v382, %v376
        %v455 = vpack.c.b16 %v383, %v377
        %v456 = vpack.c.b16 %v384, %v378
        %v457 = vpack.c.b16 %v385, %v379
        %v458 = vpack.c.b16 %v386, %v380
        %v459 = vpack.c.b16 %v387, %v381
        %v460 = vpack.c.b16 %v394, %v388
        %v461 = vpack.c.b16 %v395, %v389
        %v462 = vpack.c.b16 %v396, %v390
        %v463 = vpack.c.b16 %v397, %v391
        %v464 = vpack.c.b16 %v398, %v392
        %v465 = vpack.c.b16 %v399, %v393
        %v466 = vpack.c.b16 %v406, %v400
        %v467 = vpack.c.b16 %v407, %v401
        %v468 = vpack.c.b16 %v408, %v402
        %v469 = vpack.c.b16 %v409, %v403
        %v470 = vpack.c.b16 %v410, %v404
        %v471 = vpack.c.b16 %v411, %v405
        %v472 = vpack.c.b16 %v418, %v412
        %v473 = vpack.c.b16 %v419, %v413
        %v474 = vpack.c.b16 %v420, %v414
        %v475 = vpack.c.b16 %v421, %v415
        %v476 = vpack.c.b16 %v422, %v416
        %v477 = vpack.c.b16 %v423, %v417
        %v478 = vpack.c.b16 %v430, %v424
        %v479 = vpack.c.b16 %v431, %v425
        %v480 = vpack.c.b16 %v432, %v426
        %v481 = vpack.c.b16 %v433, %v427
        %v482 = vpack.c.b16 %v434, %v428
        %v483 = vpack.c.b16 %v435, %v429
        %532 = vmatprep.subr.bf16.mxu0 %v437
        %533 = vmatpush1.bf16.msra.mxu0 %v436
        %534 = vmatprep.subr.bf16.mxu0 %v443
        %535 = vmatpush1.bf16.msra.mxu0 %v442
        %536 = vmatprep.subr.bf16.mxu0 %v449
        %537 = vmatpush1.bf16.msra.mxu0 %v448
        %538 = vmatprep.subr.bf16.mxu0 %v455
        %539 = vmatpush1.bf16.msra.mxu0 %v454
        %540 = vmatprep.subr.bf16.mxu0 %v461
        %541 = vmatpush1.bf16.msra.mxu0 %v460
        %542 = vmatprep.subr.bf16.mxu0 %v467
        %543 = vmatpush1.bf16.msra.mxu0 %v466
        %544 = vmatprep.subr.bf16.mxu0 %v473
        %545 = vmatpush1.bf16.msra.mxu0 %v472
        %546 = vmatprep.subr.bf16.mxu0 %v479
        %547 = vmatpush1.bf16.msra.mxu0 %v478
        %548 = vmatprep.subr.bf16.mxu0 0
        %549 = vmatpush1.bf16.msra.mxu0 0
        %550 = vmatprep.subr.bf16.mxu0 0
        %551 = vmatpush1.bf16.msra.mxu0 0
        %552 = vmatprep.subr.bf16.mxu0 0
        %553 = vmatpush1.bf16.msra.mxu0 0
        %554 = vmatprep.subr.bf16.mxu0 0
        %555 = vmatpush1.bf16.msra.mxu0 0
        %556 = vmatprep.subr.bf16.mxu0 0
        %557 = vmatpush1.bf16.msra.mxu0 0
        %558 = vmatprep.subr.bf16.mxu0 0
        %559 = vmatpush1.bf16.msra.mxu0 0
        %560 = vmatprep.subr.bf16.mxu0 0
        %561 = vmatpush1.bf16.msra.mxu0 0
        %562 = vmatprep.subr.bf16.mxu0 0
        %563 = vmatpush1.bf16.msra.mxu0 0
        %564 = vmatprep.mubr.bf16.mxu0 0
        %565 = vmatmul.mubr.bf16.gmra.mrb[0].mxu0 %v276
        %v566 = vpop.f32.mrb[0].mxu0
        %v567 = vadd.f32 0.0, %v566
        %v568 = vpop.f32.mrb[0].mxu0
        %v569 = vadd.f32 0.0, %v568
        %v570 = vpop.f32.mrb[0].mxu0
        %v571 = vadd.f32 0.0, %v570
        %v572 = vpop.f32.mrb[0].mxu0
        %v573 = vadd.f32 0.0, %v572
        %574 = vmatprep.mubr.bf16.mxu0 0
        %575 = vmatmul.mubr.bf16.gmra.mrb[0].mxu0 %v277
        %v576 = vpop.f32.mrb[0].mxu0
        %v577 = vadd.f32 0.0, %v576
        %v578 = vpop.f32.mrb[0].mxu0
        %v579 = vadd.f32 0.0, %v578
        %v580 = vpop.f32.mrb[0].mxu0
        %v581 = vadd.f32 0.0, %v580
        %v582 = vpop.f32.mrb[0].mxu0
        %v583 = vadd.f32 0.0, %v582
        %584 = vmatprep.mubr.bf16.mxu0 0
        %585 = vmatmul.mubr.bf16.gmra.mrb[0].mxu0 %v278
        %v586 = vpop.f32.mrb[0].mxu0
        %v587 = vadd.f32 0.0, %v586
        %v588 = vpop.f32.mrb[0].mxu0
        %v589 = vadd.f32 0.0, %v588
        %v590 = vpop.f32.mrb[0].mxu0
        %v591 = vadd.f32 0.0, %v590
        %v592 = vpop.f32.mrb[0].mxu0
        %v593 = vadd.f32 0.0, %v592
        %594 = vmatprep.mubr.bf16.mxu0 0
        %595 = vmatmul.mubr.bf16.gmra.mrb[0].mxu0 %v279
        %v596 = vpop.f32.mrb[0].mxu0
        %v597 = vadd.f32 0.0, %v596
        %v598 = vpop.f32.mrb[0].mxu0
        %v599 = vadd.f32 0.0, %v598
        %v600 = vpop.f32.mrb[0].mxu0
        %v601 = vadd.f32 0.0, %v600
        %v602 = vpop.f32.mrb[0].mxu0
        %v603 = vadd.f32 0.0, %v602
        %604 = vmatprep.mubr.bf16.mxu0 0
        %605 = vmatmul.mubr.bf16.gmra.mrb[0].mxu0 %v280
        %v606 = vpop.f32.mrb[0].mxu0
        %v607 = vadd.f32 0.0, %v606
        %v608 = vpop.f32.mrb[0].mxu0
        %v609 = vadd.f32 0.0, %v608
        %v610 = vpop.f32.mrb[0].mxu0
        %v611 = vadd.f32 0.0, %v610
        %v612 = vpop.f32.mrb[0].mxu0
        %v613 = vadd.f32 0.0, %v612
        %614 = vmatprep.mubr.bf16.mxu0 0
        %615 = vmatmul.mubr.bf16.gmra.mrb[0].mxu0 %v281
        %v616 = vpop.f32.mrb[0].mxu0
        %v617 = vadd.f32 0.0, %v616
        %v618 = vpop.f32.mrb[0].mxu0
        %v619 = vadd.f32 0.0, %v618
        %v620 = vpop.f32.mrb[0].mxu0
        %v621 = vadd.f32 0.0, %v620
        %v622 = vpop.f32.mrb[0].mxu0
        %v623 = vadd.f32 0.0, %v622
        %624 = vmatprep.mubr.bf16.mxu0 0
        %625 = vmatmul.mubr.bf16.gmra.mrb[0].mxu0 %v282
        %v626 = vpop.f32.mrb[0].mxu0
        %v627 = vadd.f32 0.0, %v626
        %v628 = vpop.f32.mrb[0].mxu0
        %v629 = vadd.f32 0.0, %v628
        %v630 = vpop.f32.mrb[0].mxu0
        %v631 = vadd.f32 0.0, %v630
        %v632 = vpop.f32.mrb[0].mxu0
        %v633 = vadd.f32 0.0, %v632
        %634 = vmatprep.mubr.bf16.mxu0 0
        %635 = vmatmul.mubr.bf16.gmra.mrb[0].mxu0 %v283
        %v636 = vpop.f32.mrb[0].mxu0
        %v637 = vadd.f32 0.0, %v636
        %v638 = vpop.f32.mrb[0].mxu0
        %v639 = vadd.f32 0.0, %v638
        %v640 = vpop.f32.mrb[0].mxu0
        %v641 = vadd.f32 0.0, %v640
        %v642 = vpop.f32.mrb[0].mxu0
        %v643 = vadd.f32 0.0, %v642
        %644 = vdwg.mxu0
        %645 = vmatprep.subr.bf16.mxu0 %v439
        %646 = vmatpush1.bf16.msra.mxu0 %v438
        %647 = vmatprep.subr.bf16.mxu0 %v445
        %648 = vmatpush1.bf16.msra.mxu0 %v444
        %649 = vmatprep.subr.bf16.mxu0 %v451
        %650 = vmatpush1.bf16.msra.mxu0 %v450
        %651 = vmatprep.subr.bf16.mxu0 %v457
        %652 = vmatpush1.bf16.msra.mxu0 %v456
        %653 = vmatprep.subr.bf16.mxu0 %v463
        %654 = vmatpush1.bf16.msra.mxu0 %v462
        %655 = vmatprep.subr.bf16.mxu0 %v469
        %656 = vmatpush1.bf16.msra.mxu0 %v468
        %657 = vmatprep.subr.bf16.mxu0 %v475
        %658 = vmatpush1.bf16.msra.mxu0 %v474
        %659 = vmatprep.subr.bf16.mxu0 %v481
        %660 = vmatpush1.bf16.msra.mxu0 %v480
        %661 = vmatprep.subr.bf16.mxu0 0
        %662 = vmatpush1.bf16.msra.mxu0 0
        %663 = vmatprep.subr.bf16.mxu0 0
        %664 = vmatpush1.bf16.msra.mxu0 0
        %665 = vmatprep.subr.bf16.mxu0 0
        %666 = vmatpush1.bf16.msra.mxu0 0
        %667 = vmatprep.subr.bf16.mxu0 0
        %668 = vmatpush1.bf16.msra.mxu0 0
        %669 = vmatprep.subr.bf16.mxu0 0
        %670 = vmatpush1.bf16.msra.mxu0 0
        %671 = vmatprep.subr.bf16.mxu0 0
        %672 = vmatpush1.bf16.msra.mxu0 0
        %673 = vmatprep.subr.bf16.mxu0 0
        %674 = vmatpush1.bf16.msra.mxu0 0
        %675 = vmatprep.subr.bf16.mxu0 0
        %676 = vmatpush1.bf16.msra.mxu0 0
        %677 = vmatprep.mubr.bf16.mxu0 0
        %678 = vmatmul.mubr.bf16.gmra.mrb[0].mxu0 %v276
        %v679 = vpop.f32.mrb[0].mxu0
        %v680 = vadd.f32 0.0, %v679
        %v681 = vpop.f32.mrb[0].mxu0
        %v682 = vadd.f32 0.0, %v681
        %v683 = vpop.f32.mrb[0].mxu0
        %v684 = vadd.f32 0.0, %v683
        %v685 = vpop.f32.mrb[0].mxu0
        %v686 = vadd.f32 0.0, %v685
        %687 = vmatprep.mubr.bf16.mxu0 0
        %688 = vmatmul.mubr.bf16.gmra.mrb[0].mxu0 %v277
        %v689 = vpop.f32.mrb[0].mxu0
        %v690 = vadd.f32 0.0, %v689
        %v691 = vpop.f32.mrb[0].mxu0
        %v692 = vadd.f32 0.0, %v691
        %v693 = vpop.f32.mrb[0].mxu0
        %v694 = vadd.f32 0.0, %v693
        %v695 = vpop.f32.mrb[0].mxu0
        %v696 = vadd.f32 0.0, %v695
        %697 = vmatprep.mubr.bf16.mxu0 0
        %698 = vmatmul.mubr.bf16.gmra.mrb[0].mxu0 %v278
        %v699 = vpop.f32.mrb[0].mxu0
        %v700 = vadd.f32 0.0, %v699
        %v701 = vpop.f32.mrb[0].mxu0
        %v702 = vadd.f32 0.0, %v701
        %v703 = vpop.f32.mrb[0].mxu0
        %v704 = vadd.f32 0.0, %v703
        %v705 = vpop.f32.mrb[0].mxu0
        %v706 = vadd.f32 0.0, %v705
        %707 = vmatprep.mubr.bf16.mxu0 0
        %708 = vmatmul.mubr.bf16.gmra.mrb[0].mxu0 %v279
        %v709 = vpop.f32.mrb[0].mxu0
        %v710 = vadd.f32 0.0, %v709
        %v711 = vpop.f32.mrb[0].mxu0
        %v712 = vadd.f32 0.0, %v711
        %v713 = vpop.f32.mrb[0].mxu0
        %v714 = vadd.f32 0.0, %v713
        %v715 = vpop.f32.mrb[0].mxu0
        %v716 = vadd.f32 0.0, %v715
        %717 = vmatprep.mubr.bf16.mxu0 0
        %718 = vmatmul.mubr.bf16.gmra.mrb[0].mxu0 %v280
        %v719 = vpop.f32.mrb[0].mxu0
        %v720 = vadd.f32 0.0, %v719
        %v721 = vpop.f32.mrb[0].mxu0
        %v722 = vadd.f32 0.0, %v721
        %v723 = vpop.f32.mrb[0].mxu0
        %v724 = vadd.f32 0.0, %v723
        %v725 = vpop.f32.mrb[0].mxu0
        %v726 = vadd.f32 0.0, %v725
        %727 = vmatprep.mubr.bf16.mxu0 0
        %728 = vmatmul.mubr.bf16.gmra.mrb[0].mxu0 %v281
        %v729 = vpop.f32.mrb[0].mxu0
        %v730 = vadd.f32 0.0, %v729
        %v731 = vpop.f32.mrb[0].mxu0
        %v732 = vadd.f32 0.0, %v731
        %v733 = vpop.f32.mrb[0].mxu0
        %v734 = vadd.f32 0.0, %v733
        %v735 = vpop.f32.mrb[0].mxu0
        %v736 = vadd.f32 0.0, %v735
        %737 = vmatprep.mubr.bf16.mxu0 0
        %738 = vmatmul.mubr.bf16.gmra.mrb[0].mxu0 %v282
        %v739 = vpop.f32.mrb[0].mxu0
        %v740 = vadd.f32 0.0, %v739
        %v741 = vpop.f32.mrb[0].mxu0
        %v742 = vadd.f32 0.0, %v741
        %v743 = vpop.f32.mrb[0].mxu0
        %v744 = vadd.f32 0.0, %v743
        %v745 = vpop.f32.mrb[0].mxu0
        %v746 = vadd.f32 0.0, %v745
        %747 = vmatprep.mubr.bf16.mxu0 0
        %748 = vmatmul.mubr.bf16.gmra.mrb[0].mxu0 %v283
        %v749 = vpop.f32.mrb[0].mxu0
        %v750 = vadd.f32 0.0, %v749
        %v751 = vpop.f32.mrb[0].mxu0
        %v752 = vadd.f32 0.0, %v751
        %v753 = vpop.f32.mrb[0].mxu0
        %v754 = vadd.f32 0.0, %v753
        %v755 = vpop.f32.mrb[0].mxu0
        %v756 = vadd.f32 0.0, %v755
        %757 = vdwg.mxu0
        %758 = vmatprep.subr.bf16.mxu0 %v441
        %759 = vmatpush1.bf16.msra.mxu0 %v440
        %760 = vmatprep.subr.bf16.mxu0 %v447
        %761 = vmatpush1.bf16.msra.mxu0 %v446
        %762 = vmatprep.subr.bf16.mxu0 %v453
        %763 = vmatpush1.bf16.msra.mxu0 %v452
        %764 = vmatprep.subr.bf16.mxu0 %v459
        %765 = vmatpush1.bf16.msra.mxu0 %v458
        %766 = vmatprep.subr.bf16.mxu0 %v465
        %767 = vmatpush1.bf16.msra.mxu0 %v464
        %768 = vmatprep.subr.bf16.mxu0 %v471
        %769 = vmatpush1.bf16.msra.mxu0 %v470
        %770 = vmatprep.subr.bf16.mxu0 %v477
        %771 = vmatpush1.bf16.msra.mxu0 %v476
        %772 = vmatprep.subr.bf16.mxu0 %v483
        %773 = vmatpush1.bf16.msra.mxu0 %v482
        %774 = vmatprep.subr.bf16.mxu0 0
        %775 = vmatpush1.bf16.msra.mxu0 0
        %776 = vmatprep.subr.bf16.mxu0 0
        %777 = vmatpush1.bf16.msra.mxu0 0
        %778 = vmatprep.subr.bf16.mxu0 0
        %779 = vmatpush1.bf16.msra.mxu0 0
        %780 = vmatprep.subr.bf16.mxu0 0
        %781 = vmatpush1.bf16.msra.mxu0 0
        %782 = vmatprep.subr.bf16.mxu0 0
        %783 = vmatpush1.bf16.msra.mxu0 0
        %784 = vmatprep.subr.bf16.mxu0 0
        %785 = vmatpush1.bf16.msra.mxu0 0
        %786 = vmatprep.subr.bf16.mxu0 0
        %787 = vmatpush1.bf16.msra.mxu0 0
        %788 = vmatprep.subr.bf16.mxu0 0
        %789 = vmatpush1.bf16.msra.mxu0 0
        %790 = vmatprep.mubr.bf16.mxu0 0
        %791 = vmatmul.mubr.bf16.gmra.mrb[0].mxu0 %v276
        %v792 = vpop.f32.mrb[0].mxu0
        %v793 = vadd.f32 0.0, %v792
        %v794 = vpop.f32.mrb[0].mxu0
        %v795 = vadd.f32 0.0, %v794
        %v796 = vpop.f32.mrb[0].mxu0
        %v797 = vadd.f32 0.0, %v796
        %v798 = vpop.f32.mrb[0].mxu0
        %v799 = vadd.f32 0.0, %v798
        %800 = vmatprep.mubr.bf16.mxu0 0
        %801 = vmatmul.mubr.bf16.gmra.mrb[0].mxu0 %v277
        %v802 = vpop.f32.mrb[0].mxu0
        %v803 = vadd.f32 0.0, %v802
        %v804 = vpop.f32.mrb[0].mxu0
        %v805 = vadd.f32 0.0, %v804
        %v806 = vpop.f32.mrb[0].mxu0
        %v807 = vadd.f32 0.0, %v806
        %v808 = vpop.f32.mrb[0].mxu0
        %v809 = vadd.f32 0.0, %v808
        %810 = vmatprep.mubr.bf16.mxu0 0
        %811 = vmatmul.mubr.bf16.gmra.mrb[0].mxu0 %v278
        %v812 = vpop.f32.mrb[0].mxu0
        %v813 = vadd.f32 0.0, %v812
        %v814 = vpop.f32.mrb[0].mxu0
        %v815 = vadd.f32 0.0, %v814
        %v816 = vpop.f32.mrb[0].mxu0
        %v817 = vadd.f32 0.0, %v816
        %v818 = vpop.f32.mrb[0].mxu0
        %v819 = vadd.f32 0.0, %v818
        %820 = vmatprep.mubr.bf16.mxu0 0
        %821 = vmatmul.mubr.bf16.gmra.mrb[0].mxu0 %v279
        %v822 = vpop.f32.mrb[0].mxu0
        %v823 = vadd.f32 0.0, %v822
        %v824 = vpop.f32.mrb[0].mxu0
        %v825 = vadd.f32 0.0, %v824
        %v826 = vpop.f32.mrb[0].mxu0
        %v827 = vadd.f32 0.0, %v826
        %v828 = vpop.f32.mrb[0].mxu0
        %v829 = vadd.f32 0.0, %v828
        %830 = vmatprep.mubr.bf16.mxu0 0
        %831 = vmatmul.mubr.bf16.gmra.mrb[0].mxu0 %v280
        %v832 = vpop.f32.mrb[0].mxu0
        %v833 = vadd.f32 0.0, %v832
        %v834 = vpop.f32.mrb[0].mxu0
        %v835 = vadd.f32 0.0, %v834
        %v836 = vpop.f32.mrb[0].mxu0
        %v837 = vadd.f32 0.0, %v836
        %v838 = vpop.f32.mrb[0].mxu0
        %v839 = vadd.f32 0.0, %v838
        %840 = vmatprep.mubr.bf16.mxu0 0
        %841 = vmatmul.mubr.bf16.gmra.mrb[0].mxu0 %v281
        %v842 = vpop.f32.mrb[0].mxu0
        %v843 = vadd.f32 0.0, %v842
        %v844 = vpop.f32.mrb[0].mxu0
        %v845 = vadd.f32 0.0, %v844
        %v846 = vpop.f32.mrb[0].mxu0
        %v847 = vadd.f32 0.0, %v846
        %v848 = vpop.f32.mrb[0].mxu0
        %v849 = vadd.f32 0.0, %v848
        %850 = vmatprep.mubr.bf16.mxu0 0
        %851 = vmatmul.mubr.bf16.gmra.mrb[0].mxu0 %v282
        %v852 = vpop.f32.mrb[0].mxu0
        %v853 = vadd.f32 0.0, %v852
        %v854 = vpop.f32.mrb[0].mxu0
        %v855 = vadd.f32 0.0, %v854
        %v856 = vpop.f32.mrb[0].mxu0
        %v857 = vadd.f32 0.0, %v856
        %v858 = vpop.f32.mrb[0].mxu0
        %v859 = vadd.f32 0.0, %v858
        %860 = vmatprep.mubr.bf16.mxu0 0
        %861 = vmatmul.mubr.bf16.gmra.mrb[0].mxu0 %v283
        %v862 = vpop.f32.mrb[0].mxu0
        %v863 = vadd.f32 0.0, %v862
        %v864 = vpop.f32.mrb[0].mxu0
        %v865 = vadd.f32 0.0, %v864
        %v866 = vpop.f32.mrb[0].mxu0
        %v867 = vadd.f32 0.0, %v866
        %v868 = vpop.f32.mrb[0].mxu0
        %v869 = vadd.f32 0.0, %v868
        %870 = vdwg.mxu0
        %v871 = vpack.c.bf16 %v571, %v567
        %v872 = vpack.c.bf16 %v573, %v569
        %v873 = vpack.c.bf16 %v684, %v680
        %v874 = vpack.c.bf16 %v686, %v682
        %v875 = vpack.c.bf16 %v797, %v793
        %v876 = vpack.c.bf16 %v799, %v795
        %v877 = vpack.c.bf16 %v581, %v577
        %v878 = vpack.c.bf16 %v583, %v579
        %v879 = vpack.c.bf16 %v694, %v690
        %v880 = vpack.c.bf16 %v696, %v692
        %v881 = vpack.c.bf16 %v807, %v803
        %v882 = vpack.c.bf16 %v809, %v805
        %v883 = vpack.c.bf16 %v591, %v587
        %v884 = vpack.c.bf16 %v593, %v589
        %v885 = vpack.c.bf16 %v704, %v700
        %v886 = vpack.c.bf16 %v706, %v702
        %v887 = vpack.c.bf16 %v817, %v813
        %v888 = vpack.c.bf16 %v819, %v815
        %v889 = vpack.c.bf16 %v601, %v597
        %v890 = vpack.c.bf16 %v603, %v599
        %v891 = vpack.c.bf16 %v714, %v710
        %v892 = vpack.c.bf16 %v716, %v712
        %v893 = vpack.c.bf16 %v827, %v823
        %v894 = vpack.c.bf16 %v829, %v825
        %v895 = vpack.c.bf16 %v611, %v607
        %v896 = vpack.c.bf16 %v613, %v609
        %v897 = vpack.c.bf16 %v724, %v720
        %v898 = vpack.c.bf16 %v726, %v722
        %v899 = vpack.c.bf16 %v837, %v833
        %v900 = vpack.c.bf16 %v839, %v835
        %v901 = vpack.c.bf16 %v621, %v617
        %v902 = vpack.c.bf16 %v623, %v619
        %v903 = vpack.c.bf16 %v734, %v730
        %v904 = vpack.c.bf16 %v736, %v732
        %v905 = vpack.c.bf16 %v847, %v843
        %v906 = vpack.c.bf16 %v849, %v845
        %v907 = vpack.c.bf16 %v631, %v627
        %v908 = vpack.c.bf16 %v633, %v629
        %v909 = vpack.c.bf16 %v744, %v740
        %v910 = vpack.c.bf16 %v746, %v742
        %v911 = vpack.c.bf16 %v857, %v853
        %v912 = vpack.c.bf16 %v859, %v855
        %v913 = vpack.c.bf16 %v641, %v637
        %v914 = vpack.c.bf16 %v643, %v639
        %v915 = vpack.c.bf16 %v754, %v750
        %v916 = vpack.c.bf16 %v756, %v752
        %v917 = vpack.c.bf16 %v867, %v863
        %v918 = vpack.c.bf16 %v869, %v865
        %v967 = vunpack.c.l.b16 %v871
        %v968 = vunpack.c.l.b16 %v872
        %v969 = vunpack.c.l.b16 %v873
        %v970 = vunpack.c.l.b16 %v874
        %v971 = vunpack.c.l.b16 %v875
        %v972 = vunpack.c.l.b16 %v876
        %v973 = vunpack.c.h.b16 %v871
        %v974 = vunpack.c.h.b16 %v872
        %v975 = vunpack.c.h.b16 %v873
        %v976 = vunpack.c.h.b16 %v874
        %v977 = vunpack.c.h.b16 %v875
        %v978 = vunpack.c.h.b16 %v876
        %v979 = vunpack.c.l.b16 %v877
        %v980 = vunpack.c.l.b16 %v878
        %v981 = vunpack.c.l.b16 %v879
        %v982 = vunpack.c.l.b16 %v880
        %v983 = vunpack.c.l.b16 %v881
        %v984 = vunpack.c.l.b16 %v882
        %v985 = vunpack.c.h.b16 %v877
        %v986 = vunpack.c.h.b16 %v878
        %v987 = vunpack.c.h.b16 %v879
        %v988 = vunpack.c.h.b16 %v880
        %v989 = vunpack.c.h.b16 %v881
        %v990 = vunpack.c.h.b16 %v882
        %v991 = vunpack.c.l.b16 %v883
        %v992 = vunpack.c.l.b16 %v884
        %v993 = vunpack.c.l.b16 %v885
        %v994 = vunpack.c.l.b16 %v886
        %v995 = vunpack.c.l.b16 %v887
        %v996 = vunpack.c.l.b16 %v888
        %v997 = vunpack.c.h.b16 %v883
        %v998 = vunpack.c.h.b16 %v884
        %v999 = vunpack.c.h.b16 %v885
        %v1000 = vunpack.c.h.b16 %v886
        %v1001 = vunpack.c.h.b16 %v887
        %v1002 = vunpack.c.h.b16 %v888
        %v1003 = vunpack.c.l.b16 %v889
        %v1004 = vunpack.c.l.b16 %v890
        %v1005 = vunpack.c.l.b16 %v891
        %v1006 = vunpack.c.l.b16 %v892
        %v1007 = vunpack.c.l.b16 %v893
        %v1008 = vunpack.c.l.b16 %v894
        %v1009 = vunpack.c.h.b16 %v889
        %v1010 = vunpack.c.h.b16 %v890
        %v1011 = vunpack.c.h.b16 %v891
        %v1012 = vunpack.c.h.b16 %v892
        %v1013 = vunpack.c.h.b16 %v893
        %v1014 = vunpack.c.h.b16 %v894
        %v1015 = vunpack.c.l.b16 %v895
        %v1016 = vunpack.c.l.b16 %v896
        %v1017 = vunpack.c.l.b16 %v897
        %v1018 = vunpack.c.l.b16 %v898
        %v1019 = vunpack.c.l.b16 %v899
        %v1020 = vunpack.c.l.b16 %v900
        %v1021 = vunpack.c.h.b16 %v895
        %v1022 = vunpack.c.h.b16 %v896
        %v1023 = vunpack.c.h.b16 %v897
        %v1024 = vunpack.c.h.b16 %v898
        %v1025 = vunpack.c.h.b16 %v899
        %v1026 = vunpack.c.h.b16 %v900
        %v1027 = vunpack.c.l.b16 %v901
        %v1028 = vunpack.c.l.b16 %v902
        %v1029 = vunpack.c.l.b16 %v903
        %v1030 = vunpack.c.l.b16 %v904
        %v1031 = vunpack.c.l.b16 %v905
        %v1032 = vunpack.c.l.b16 %v906
        %v1033 = vunpack.c.h.b16 %v901
        %v1034 = vunpack.c.h.b16 %v902
        %v1035 = vunpack.c.h.b16 %v903
        %v1036 = vunpack.c.h.b16 %v904
        %v1037 = vunpack.c.h.b16 %v905
        %v1038 = vunpack.c.h.b16 %v906
        %v1039 = vunpack.c.l.b16 %v907
        %v1040 = vunpack.c.l.b16 %v908
        %v1041 = vunpack.c.l.b16 %v909
        %v1042 = vunpack.c.l.b16 %v910
        %v1043 = vunpack.c.l.b16 %v911
        %v1044 = vunpack.c.l.b16 %v912
        %v1045 = vunpack.c.h.b16 %v907
        %v1046 = vunpack.c.h.b16 %v908
        %v1047 = vunpack.c.h.b16 %v909
        %v1048 = vunpack.c.h.b16 %v910
        %v1049 = vunpack.c.h.b16 %v911
        %v1050 = vunpack.c.h.b16 %v912
        %v1051 = vunpack.c.l.b16 %v913
        %v1052 = vunpack.c.l.b16 %v914
        %v1053 = vunpack.c.l.b16 %v915
        %v1054 = vunpack.c.l.b16 %v916
        %v1055 = vunpack.c.l.b16 %v917
        %v1056 = vunpack.c.l.b16 %v918
        %v1057 = vunpack.c.h.b16 %v913
        %v1058 = vunpack.c.h.b16 %v914
        %v1059 = vunpack.c.h.b16 %v915
        %v1060 = vunpack.c.h.b16 %v916
        %v1061 = vunpack.c.h.b16 %v917
        %v1062 = vunpack.c.h.b16 %v918
        %v1063 = vpack.c.b16 %v968, %v967
        %v1064 = vpack.c.b16 %v970, %v969
        %v1065 = vpack.c.b16 %v972, %v971
        %v1066 = vpack.c.b16 %v974, %v973
        %v1067 = vpack.c.b16 %v976, %v975
        %v1068 = vpack.c.b16 %v978, %v977
        %v1069 = vpack.c.b16 %v980, %v979
        %v1070 = vpack.c.b16 %v982, %v981
        %v1071 = vpack.c.b16 %v984, %v983
        %v1072 = vpack.c.b16 %v986, %v985
        %v1073 = vpack.c.b16 %v988, %v987
        %v1074 = vpack.c.b16 %v990, %v989
        %v1075 = vpack.c.b16 %v992, %v991
        %v1076 = vpack.c.b16 %v994, %v993
        %v1077 = vpack.c.b16 %v996, %v995
        %v1078 = vpack.c.b16 %v998, %v997
        %v1079 = vpack.c.b16 %v1000, %v999
        %v1080 = vpack.c.b16 %v1002, %v1001
        %v1081 = vpack.c.b16 %v1004, %v1003
        %v1082 = vpack.c.b16 %v1006, %v1005
        %v1083 = vpack.c.b16 %v1008, %v1007
        %v1084 = vpack.c.b16 %v1010, %v1009
        %v1085 = vpack.c.b16 %v1012, %v1011
        %v1086 = vpack.c.b16 %v1014, %v1013
        %v1087 = vpack.c.b16 %v1016, %v1015
        %v1088 = vpack.c.b16 %v1018, %v1017
        %v1089 = vpack.c.b16 %v1020, %v1019
        %v1090 = vpack.c.b16 %v1022, %v1021
        %v1091 = vpack.c.b16 %v1024, %v1023
        %v1092 = vpack.c.b16 %v1026, %v1025
        %v1093 = vpack.c.b16 %v1028, %v1027
        %v1094 = vpack.c.b16 %v1030, %v1029
        %v1095 = vpack.c.b16 %v1032, %v1031
        %v1096 = vpack.c.b16 %v1034, %v1033
        %v1097 = vpack.c.b16 %v1036, %v1035
        %v1098 = vpack.c.b16 %v1038, %v1037
        %v1099 = vpack.c.b16 %v1040, %v1039
        %v1100 = vpack.c.b16 %v1042, %v1041
        %v1101 = vpack.c.b16 %v1044, %v1043
        %v1102 = vpack.c.b16 %v1046, %v1045
        %v1103 = vpack.c.b16 %v1048, %v1047
        %v1104 = vpack.c.b16 %v1050, %v1049
        %v1105 = vpack.c.b16 %v1052, %v1051
        %v1106 = vpack.c.b16 %v1054, %v1053
        %v1107 = vpack.c.b16 %v1056, %v1055
        %v1108 = vpack.c.b16 %v1058, %v1057
        %v1109 = vpack.c.b16 %v1060, %v1059
        %v1110 = vpack.c.b16 %v1062, %v1061
        %1159 = vst [vmem:[%s176] sm:$0xff] %v1063
        %1160 = vst [vmem:[%s176 + $0x8] sm:$0xff] %v1064
        %1161 = vst [vmem:[%s176 + $0x10] sm:$0xff] %v1065
        %1162 = vst [vmem:[%s176 + $0x18] sm:$0xff] %v1066
        %1163 = vst [vmem:[%s176 + $0x20] sm:$0xff] %v1067
        %1164 = vst [vmem:[%s176 + $0x28] sm:$0xff] %v1068
        %1165 = vst [vmem:[%s176 + $0x30] sm:$0xff] %v1069
        %1166 = vst [vmem:[%s176 + $0x38] sm:$0xff] %v1070
        %1167 = vst [vmem:[%s176 + $0x40] sm:$0xff] %v1071
        %1168 = vst [vmem:[%s176 + $0x48] sm:$0xff] %v1072
        %1169 = vst [vmem:[%s176 + $0x50] sm:$0xff] %v1073
        %1170 = vst [vmem:[%s176 + $0x58] sm:$0xff] %v1074
        %1171 = vst [vmem:[%s176 + $0x60] sm:$0xff] %v1075
        %1172 = vst [vmem:[%s176 + $0x68] sm:$0xff] %v1076
        %1173 = vst [vmem:[%s176 + $0x70] sm:$0xff] %v1077
        %1174 = vst [vmem:[%s176 + $0x78] sm:$0xff] %v1078
        %1175 = vst [vmem:[%s176 + $0x80] sm:$0xff] %v1079
        %1176 = vst [vmem:[%s176 + $0x88] sm:$0xff] %v1080
        %1177 = vst [vmem:[%s176 + $0x90] sm:$0xff] %v1081
        %1178 = vst [vmem:[%s176 + $0x98] sm:$0xff] %v1082
        %1179 = vst [vmem:[%s176 + $0xa0] sm:$0xff] %v1083
        %1180 = vst [vmem:[%s176 + $0xa8] sm:$0xff] %v1084
        %1181 = vst [vmem:[%s176 + $0xb0] sm:$0xff] %v1085
        %1182 = vst [vmem:[%s176 + $0xb8] sm:$0xff] %v1086
        %1183 = vst [vmem:[%s176 + $0xc0] sm:$0xff] %v1087
        %1184 = vst [vmem:[%s176 + $0xc8] sm:$0xff] %v1088
        %1185 = vst [vmem:[%s176 + $0xd0] sm:$0xff] %v1089
        %1186 = vst [vmem:[%s176 + $0xd8] sm:$0xff] %v1090
        %1187 = vst [vmem:[%s176 + $0xe0] sm:$0xff] %v1091
        %1188 = vst [vmem:[%s176 + $0xe8] sm:$0xff] %v1092
        %1189 = vst [vmem:[%s176 + $0xf0] sm:$0xff] %v1093
        %1190 = vst [vmem:[%s176 + $0xf8] sm:$0xff] %v1094
        %1191 = vst [vmem:[%s176 + $0x100] sm:$0xff] %v1095
        %1192 = vst [vmem:[%s176 + $0x108] sm:$0xff] %v1096
        %1193 = vst [vmem:[%s176 + $0x110] sm:$0xff] %v1097
        %1194 = vst [vmem:[%s176 + $0x118] sm:$0xff] %v1098
        %1195 = vst [vmem:[%s176 + $0x120] sm:$0xff] %v1099
        %1196 = vst [vmem:[%s176 + $0x128] sm:$0xff] %v1100
        %1197 = vst [vmem:[%s176 + $0x130] sm:$0xff] %v1101
        %1198 = vst [vmem:[%s176 + $0x138] sm:$0xff] %v1102
        %1199 = vst [vmem:[%s176 + $0x140] sm:$0xff] %v1103
        %1200 = vst [vmem:[%s176 + $0x148] sm:$0xff] %v1104
        %1201 = vst [vmem:[%s176 + $0x150] sm:$0xff] %v1105
        %1202 = vst [vmem:[%s176 + $0x158] sm:$0xff] %v1106
        %1203 = vst [vmem:[%s176 + $0x160] sm:$0xff] %v1107
        %1204 = vst [vmem:[%s176 + $0x168] sm:$0xff] %v1108
        %1205 = vst [vmem:[%s176 + $0x170] sm:$0xff] %v1109
        %1206 = vst [vmem:[%s176 + $0x178] sm:$0xff] %v1110
        %s1207 = sand.u32 %s75, 1
        %s1208 = scalar_lea.sflag [#allocation4], %s1207
        %s1209 = sand.u32 %s75, 1
        %s1210 = smul.addr %s1209, 384
        %s1211 = scalar_lea.vmem [#allocation7], %s1210
        // Predicated region
        $region37: #{tpu_custom_call.1} parent=27 // pred_check
          %p1212 = pneg %p85
        $region38: #{tpu_custom_call.1} parent=27 // pred_check_branch
          %1214 = sbr.rel (%p1212) target = $region40
        $region39: #{tpu_custom_call.1} parent=27 // pred_region
          %s1215 = smul.u32 16, %s20
          %s1217 = ssub.s32 6144, 6144
          %1218 = vsyncadd %s1208, %s1217
          %s1219 = smul.addr %s1215, 6
          %s1220 = smul.addr %s1219, 64
          %s1221 = scalar_lea.hbm %s2, %s1220
          %s1222 = sshll.u32 %s1211, 4
          %s1223 = int_to_ptr.vmem [resolvable:$true] %s1222
          %1228 = dma.vmem_to_hbm [thread:$0]  %s1223, 6144, %s1221, %s1208, 384, 384, 24
        $region40: #{tpu_custom_call.1} parent=27 // pred_fallthru
          _
      $region28: #{tpu_custom_call.1} parent=5 // pred_fallthru
        _
      %p1229 = scmp.le.s32.totalorder 2, %s15
      // Predicated region
      $region41: #{tpu_custom_call.1} parent=5 // pred_check
        %p1230 = pneg %p1229
      $region42: #{tpu_custom_call.1} parent=5 // pred_check_branch
        %1232 = sbr.rel (%p1230) target = $region44
      $region43: #{tpu_custom_call.1} parent=5 // pred_region
        %s1233 = ssub.s32 %s15, 2
        // Predicated region
        $region45: #{tpu_custom_call.1} parent=43 // pred_check
          %p1234 = pneg %p91
        $region46: #{tpu_custom_call.1} parent=43 // pred_check_branch
          %1236 = sbr.rel (%p1234) target = $region48
        $region47: #{tpu_custom_call.1} parent=43 // pred_region
          %s1237 = sand.u32 %s76, 1
          %s1238 = scalar_lea.sflag [#allocation4], %s1237
          %s1239 = sand.u32 %s76, 1
          %s1240 = smul.addr %s1239, 384
          %s1241 = scalar_lea.vmem [#allocation7], %s1240
          %1242 = dma.done %s1238, 6144
        $region48: #{tpu_custom_call.1} parent=43 // pred_fallthru
          _
      $region44: #{tpu_custom_call.1} parent=5 // pred_fallthru
        _
    $region6: #{tpu_custom_call.1} parent=1 // loop_footer
      %s19 = sadd.s32 1, %s15
    $region7: #{tpu_custom_call.1} parent=1 // loop_footer_branch
      %14 = sbr.rel target = $region3
    $region8: #{tpu_custom_call.1} parent=1 // loop_exit
      _
    %1243 = vsyncpa [#allocation3], 1
    %s1244 = scalar_lea.sflag [#allocation3], 1
    %1245 = vsyncpa %s1244, 1
    %1246 = vsyncpa [#allocation6], 1
    %1247 = vsyncpa [#allocation4], 1
    %s1248 = scalar_lea.sflag [#allocation4], 1
    %1249 = vsyncpa %s1248, 1

</llo_original>
